<compile_context>
chip_gen: v7x
topology: tpu7x:2x2x1
jax: 0.10.0
libtpu: 0.0.40
codegen_flags: <defaults>
</compile_context>

<pallas_src>
import functools

import jax
import jax.numpy as jnp
from jax.experimental import pallas as pl
from jax.experimental.pallas import tpu as pltpu

RMS_EPS = 1e-6  # LlamaRMSNorm default eps
_I32_MAX = 2147483647


def _round_up(x, m):
    return (x + m - 1) // m * m


def _vmem_budget_bytes():
    """Per-generation VMEM budget: ~3/4 of physical, capped at 96 MiB.
    v7x (64 MiB physical) -> 48 MiB; v5e/v6e (128 MiB) -> 96 MiB."""
    phys = 64 * 1024 * 1024  # conservative default = smallest generation (v7x)
    try:
        info = pltpu.get_tpu_info()
        phys = int(getattr(info, "vmem_capacity_bytes", phys))
    except Exception:
        pass
    return min(phys * 3 // 4, 96 * 1024 * 1024)


def _choose_tiles(N, H, V_pad, x_bytes, vmem_limit):
    """Pick (TM, TV).

    TM as large as possible (each row tile re-streams the full V x H weight
    from HBM, and the kernel is weight-bandwidth bound), capped at 512.
    TV = largest multiple-of-256 divisor of V_pad whose double-buffered bf16
    weight tile still fits the remaining VMEM budget (capped at 4096)."""
    q = V_pad // 256
    tv_divs = sorted(256 * d for d in range(1, q + 1) if q % d == 0)
    slack = 2 * 1024 * 1024
    tm = min(512, _round_up(N, 8))
    tv = None
    while True:
        fixed = 2 * tm * H * x_bytes        # x double-buffer
        fixed += tm * H * 2                 # cached normalized rows (bf16)
        fixed += 2 * H * 4                  # gamma double-buffer (f32)
        fixed += slack                      # out blocks / accumulators / misc
        tv_max = min((vmem_limit - fixed) // (2 * H * 2), 4096)
        fits = [d for d in tv_divs if d <= tv_max]
        if fits:
            tv = fits[-1]
            break
        if tm <= 8:
            break
        tm = max(8, tm // 2)
    if tv is None:
        tv = tv_divs[0]  # huge-H fallback: smallest 256-aligned tile
    return tm, tv


def prepare_lm_head_weight(lm_head_weight):
    """One-time weight prep (call at init, NOT per forward): cast to bf16 and
    pad the vocab dim to a multiple of 256 (MXU tile / bf16 packing).
    Returns (prepared_weight, v_real)."""
    V, _ = lm_head_weight.shape
    w = lm_head_weight.astype(jnp.bfloat16)
    V_pad = _round_up(V, 256)
    if V_pad != V:
        w = jnp.pad(w, ((0, V_pad - V), (0, 0)))
    return w, V


def _lm_head_topk_kernel(x_ref, g_ref, w_ref, tok_ref,
                         xn_ref, max_ref, idx_ref, *, v_real, tv, needs_mask):
    # x_ref : (TM, H)  f32/bf16  hidden-state rows (flattened B*S, padded)
    # g_ref : (1, H)   f32       RMSNorm gamma
    # w_ref : (TV, H)  bf16      lm_head weight tile (native (V, H) layout)
    # tok_ref:(TM, 1)  i32       argmax token ids (written on last vocab step)
    # xn_ref: (TM, H)  bf16      cached normalized rows
    # max_ref/idx_ref: (TM, 1)   f32/i32 running (max, argmax) accumulators
    kv = pl.program_id(1)

    @pl.when(kv == 0)
    def _init():
        # RMSNorm once per row tile (fp32 math, like HF LlamaRMSNorm).
        x = x_ref[...].astype(jnp.float32)
        var = jnp.mean(x * x, axis=-1, keepdims=True)
        xn = x * jax.lax.rsqrt(var + RMS_EPS) * g_ref[...]
        xn_ref[...] = xn.astype(xn_ref.dtype)
        max_ref[...] = jnp.full_like(max_ref, -jnp.inf)
        idx_ref[...] = jnp.zeros_like(idx_ref)

    # (TM, H) x (TV, H)^T on the MXU, fp32 accumulation.
    logits = jax.lax.dot_general(
        xn_ref[...], w_ref[...],
        dimension_numbers=(((1,), (1,)), ((), ())),
        preferred_element_type=jnp.float32,
    )  # (TM, TV)

    # (1, TV) column ids for this vocab tile; broadcasts in the compares below.
    col_ids = kv * tv + jax.lax.broadcasted_iota(jnp.int32, (1, tv), 1)

    if needs_mask:
        # Only the last vocab tile contains padded columns (col_ids < v_real is
        # trivially all-true on every earlier tile). Statically skipped when
        # the padded vocab equals the real vocab.
        logits = jnp.where(col_ids < v_real, logits, -jnp.inf)

    # Tile-local top-1 (first occurrence on ties within the tile).
    tile_max = jnp.max(logits, axis=-1, keepdims=True)                # (TM, 1)
    cand = jnp.where(logits == tile_max, col_ids, jnp.int32(_I32_MAX))
    tile_idx = jnp.min(cand, axis=-1, keepdims=True)                  # (TM, 1)

    # Online update; strict '>' preserves first-occurrence across vocab tiles.
    better = tile_max > max_ref[...]
    max_ref[...] = jnp.where(better, tile_max, max_ref[...])
    idx_ref[...] = jnp.where(better, tile_idx, idx_ref[...])

    @pl.when(kv == pl.num_programs(1) - 1)
    def _finalize():
        tok_ref[...] = idx_ref[...]


def lm_head_with_topk(hidden_states, norm_weight, lm_head_weight, *,
                      v_real=None, tm=None, tv=None, vmem_limit_bytes=None):
    """hidden_states: (B, S, H) f32/bf16; norm_weight: (H,).

    lm_head_weight:
      * output of prepare_lm_head_weight() (bf16, vocab padded to 256) with
        v_real = true vocab size -> zero per-call weight copies (preferred), or
      * raw (V, H) float weight (v_real=None) -> cast/padded per call, which
        costs one extra full HBM pass of the weight (fine for tests only).
    """
    B, S, H = hidden_states.shape
    if v_real is None:
        lm_head_weight, v_real = prepare_lm_head_weight(lm_head_weight)
    V_pad, Hw = lm_head_weight.shape
    assert Hw == H, (Hw, H)
    N = B * S
    x_bytes = jnp.dtype(hidden_states.dtype).itemsize

    if vmem_limit_bytes is None:
        vmem_limit_bytes = _vmem_budget_bytes()

    tm_auto, tv_auto = _choose_tiles(N, H, V_pad, x_bytes, vmem_limit_bytes)
    TM = tm if tm is not None else tm_auto
    TM = _round_up(min(TM, _round_up(N, 8)), 8)
    TV = tv if tv is not None else tv_auto
    TV = _round_up(TV, 8)

    N_pad = _round_up(max(N, TM), TM)
    if V_pad % TV != 0:
        # Only reachable with a user-supplied TV that doesn't divide the
        # prepared vocab; pads per call (avoid in production).
        new_V_pad = _round_up(V_pad, TV)
        lm_head_weight = jnp.pad(lm_head_weight,
                                 ((0, new_V_pad - V_pad), (0, 0)))
        V_pad = new_V_pad

    x = hidden_states.reshape(N, H)          # native dtype; no forced f32 cast
    if N_pad != N:
        x = jnp.pad(x, ((0, N_pad - N), (0, 0)))
    g = norm_weight.reshape(1, H).astype(jnp.float32)

    grid = (N_pad // TM, V_pad // TV)
    needs_mask = V_pad != v_real

    cost = pl.CostEstimate(
        flops=2 * N_pad * H * V_pad,
        transcendentals=N_pad,
        # Weight is re-streamed from HBM once per row tile.
        bytes_accessed=(grid[0] * V_pad * H * 2
                        + N_pad * H * x_bytes + N_pad * 4 + H * 4),
    )

    kernel = functools.partial(_lm_head_topk_kernel,
                               v_real=v_real, tv=TV, needs_mask=needs_mask)

    tok = pl.pallas_call(
        kernel,
        out_shape=jax.ShapeDtypeStruct((N_pad, 1), jnp.int32),
        grid=grid,
        in_specs=[
            pl.BlockSpec((TM, H), lambda i, j: (i, 0)),   # hidden rows
            pl.BlockSpec((1, H), lambda i, j: (0, 0)),    # RMSNorm gamma
            pl.BlockSpec((TV, H), lambda i, j: (j, 0)),   # lm_head weight tile
        ],
        out_specs=pl.BlockSpec((TM, 1), lambda i, j: (i, 0)),
        scratch_shapes=[
            pltpu.VMEM((TM, H), jnp.bfloat16),   # cached normalized rows
            pltpu.VMEM((TM, 1), jnp.float32),    # running max
            pltpu.VMEM((TM, 1), jnp.int32),      # running argmax
        ],
        compiler_params=pltpu.CompilerParams(
            dimension_semantics=("parallel", "arbitrary"),
            vmem_limit_bytes=int(vmem_limit_bytes),
        ),
        cost_estimate=cost,
    )(x, g, lm_head_weight)

    # TODO(synk): torch returns int64 token ids; int32 is emitted here.
    return tok[:N].reshape(B, S, 1)


def _reference(hidden_states, norm_weight, lm_head_weight):
    # bf16-consistent reference (same rounding as the kernel matmul).
    x = hidden_states.astype(jnp.float32)
    var = jnp.mean(x * x, axis=-1, keepdims=True)
    normed = x * jax.lax.rsqrt(var + RMS_EPS) * norm_weight.astype(jnp.float32)
    logits = jax.lax.dot_general(
        normed.astype(jnp.bfloat16),
        lm_head_weight.astype(jnp.bfloat16),
        dimension_numbers=(((2,), (1,)), ((), ())),
        preferred_element_type=jnp.float32,
    )
    return jnp.argmax(logits, axis=-1, keepdims=True).astype(jnp.int32)


if __name__ == "__main__":
    B, S, H, V = 2, 8, 32, 512

    key = jax.random.PRNGKey(0)
    k_x, k_g, k_w = jax.random.split(key, 3)

    hidden_states = jax.random.normal(k_x, (B, S, H), dtype=jnp.float32)
    norm_weight = 1.0 + 0.02 * jax.random.normal(k_g, (H,), dtype=jnp.float32)
    lm_head_weight = 0.02 * jax.random.normal(k_w, (V, H), dtype=jnp.float32)

    # One-time weight prep (no per-call cast/pad copies afterwards).
    w_prep, v_real = prepare_lm_head_weight(lm_head_weight)

    # Case 1: prepared-weight path; tm=8 / tv=256 -> 2 row tiles x 2 vocab
    # tiles, exercising the online running-argmax and the cached-RMSNorm path.
    token = lm_head_with_topk(hidden_states, norm_weight, w_prep,
                              v_real=v_real, tm=8, tv=256)
    token = jax.block_until_ready(token)
    ref = _reference(hidden_states, norm_weight, lm_head_weight)
    assert token.shape == (B, S, 1), token.shape
    assert bool(jnp.all(token == ref)), "mismatch vs reference (case 1)"

    # Case 2: raw-weight path + row padding (N=5 -> 8) + vocab masking
    # (V=200 -> 256) with two vocab tiles (tv=128).
    B2, S2, V2 = 1, 5, 200
    hs2 = jax.random.normal(jax.random.PRNGKey(1), (B2, S2, H), dtype=jnp.float32)
    w2 = 0.02 * jax.random.normal(jax.random.PRNGKey(2), (V2, H), dtype=jnp.float32)
    tok2 = jax.block_until_ready(
        lm_head_with_topk(hs2, norm_weight, w2, tv=128))
    ref2 = _reference(hs2, norm_weight, w2)
    assert tok2.shape == (B2, S2, 1), tok2.shape
    assert bool(jnp.all(tok2 == ref2)), "mismatch vs reference (case 2)"

    # Case 3: bf16 hidden states (halved activation traffic), default tiling.
    hs3 = hidden_states.astype(jnp.bfloat16)
    tok3 = jax.block_until_ready(
        lm_head_with_topk(hs3, norm_weight, w_prep, v_real=v_real))
    ref3 = _reference(hs3, norm_weight, lm_head_weight)
    assert tok3.shape == (B, S, 1), tok3.shape
    assert bool(jnp.all(tok3 == ref3)), "mismatch vs reference (case 3, bf16 x)"

    print("KERNEL_OK")
</pallas_src>

<mosaic_0001>
module attributes {stable_mosaic.version = 11 : i64} {
  func.func @_lm_head_topk_kernel(%arg0: i32, %arg1: i32, %arg2: memref<8x32xf32, #tpu.memory_space<vmem>>, %arg3: memref<1x32xf32, #tpu.memory_space<vmem>>, %arg4: memref<256x32xbf16, #tpu.memory_space<vmem>>, %arg5: memref<8x1xi32, #tpu.memory_space<vmem>>, %arg6: memref<8x32xbf16, #tpu.memory_space<vmem>>, %arg7: memref<8x1xf32, #tpu.memory_space<vmem>>, %arg8: memref<8x1xi32, #tpu.memory_space<vmem>>) attributes {dimension_semantics = [#tpu.dimension_semantics<parallel>, #tpu.dimension_semantics<arbitrary>], iteration_bounds = array<i64: 2, 2>, scalar_prefetch = 0 : i64, scratch_operands = 3 : i64, tpu.core_type = #tpu.core_type<tc>, window_params = [{transform_indices = @transform_0, window_bounds = array<i64: 8, 32>}, {pipeline_mode = #tpu.pipeline_mode<synchronous>, transform_indices = @transform_1, window_bounds = array<i64: 1, 32>}, {transform_indices = @transform_2, window_bounds = array<i64: 256, 32>}, {transform_indices = @transform_3, window_bounds = array<i64: 8, 1>}]} {
    %c0_i32 = arith.constant 0 : i32
    %0 = arith.cmpi eq, %arg1, %c0_i32 : i32
    %1 = arith.extui %0 : i1 to i32
    %c0_i32_0 = arith.constant 0 : i32
    %2 = arith.cmpi ne, %1, %c0_i32_0 : i32
    scf.if %2 {
      %c0_17 = arith.constant 0 : index
      %c0_18 = arith.constant 0 : index
      %31 = vector.load %arg2[%c0_17, %c0_18] : memref<8x32xf32, #tpu.memory_space<vmem>>, vector<8x32xf32>
      %32 = arith.mulf %31, %31 : vector<8x32xf32>
      %cst_19 = arith.constant dense<0.000000e+00> : vector<8xf32>
      %33 = vector.multi_reduction <add>, %32, %cst_19 [1] : vector<8x32xf32> to vector<8xf32>
      %34 = vector.shape_cast %33 : vector<8xf32> to vector<8x1xf32>
      %cst_20 = arith.constant 3.200000e+01 : f32
      %35 = vector.broadcast %cst_20 : f32 to vector<8x1xf32>
      %36 = arith.divf %34, %35 : vector<8x1xf32>
      %cst_21 = arith.constant 9.99999997E-7 : f32
      %37 = vector.broadcast %cst_21 : f32 to vector<8x1xf32>
      %38 = arith.addf %36, %37 : vector<8x1xf32>
      %39 = math.rsqrt %38 : vector<8x1xf32>
      %40 = vector.broadcast %39 : vector<8x1xf32> to vector<8x32xf32>
      %41 = arith.mulf %31, %40 : vector<8x32xf32>
      %c0_22 = arith.constant 0 : index
      %c0_23 = arith.constant 0 : index
      %42 = vector.load %arg3[%c0_22, %c0_23] : memref<1x32xf32, #tpu.memory_space<vmem>>, vector<1x32xf32>
      %43 = vector.broadcast %42 : vector<1x32xf32> to vector<8x32xf32>
      %44 = arith.mulf %41, %43 : vector<8x32xf32>
      %45 = arith.truncf %44 : vector<8x32xf32> to vector<8x32xbf16>
      %c0_24 = arith.constant 0 : index
      %c0_25 = arith.constant 0 : index
      %46 = vector.load %arg6[%c0_24, %c0_25] : memref<8x32xbf16, #tpu.memory_space<vmem>>, vector<8x32xbf16>
      tpu.vector_store %arg6[%c0_24, %c0_25], %45 {strides = array<i32>} : memref<8x32xbf16, #tpu.memory_space<vmem>>, vector<8x32xbf16>,
      %cst_26 = arith.constant 0xFF800000 : f32
      %47 = vector.broadcast %cst_26 : f32 to vector<8x1xf32>
      %c0_27 = arith.constant 0 : index
      %c0_28 = arith.constant 0 : index
      %48 = vector.load %arg7[%c0_27, %c0_28] : memref<8x1xf32, #tpu.memory_space<vmem>>, vector<8x1xf32>
      tpu.vector_store %arg7[%c0_27, %c0_28], %47 {strides = array<i32>} : memref<8x1xf32, #tpu.memory_space<vmem>>, vector<8x1xf32>,
      %c0_i32_29 = arith.constant 0 : i32
      %49 = vector.broadcast %c0_i32_29 : i32 to vector<8x1xi32>
      %c0_30 = arith.constant 0 : index
      %c0_31 = arith.constant 0 : index
      %50 = vector.load %arg8[%c0_30, %c0_31] : memref<8x1xi32, #tpu.memory_space<vmem>>, vector<8x1xi32>
      tpu.vector_store %arg8[%c0_30, %c0_31], %49 {strides = array<i32>} : memref<8x1xi32, #tpu.memory_space<vmem>>, vector<8x1xi32>,
    } else {
    }
    %c0 = arith.constant 0 : index
    %c0_1 = arith.constant 0 : index
    %3 = vector.load %arg6[%c0, %c0_1] : memref<8x32xbf16, #tpu.memory_space<vmem>>, vector<8x32xbf16>
    %c0_2 = arith.constant 0 : index
    %c0_3 = arith.constant 0 : index
    %4 = vector.load %arg4[%c0_2, %c0_3] : memref<256x32xbf16, #tpu.memory_space<vmem>>, vector<256x32xbf16>
    %cst = arith.constant dense<0.000000e+00> : vector<8x256xf32>
    %5 = tpu.matmul %3, %4, %cst {dimension_numbers = #tpu.dot_dimension_numbers<[1], [1], [0], [0], [0, 0, 1, 0], [], []>} : vector<8x32xbf16>, vector<256x32xbf16>, vector<8x256xf32> -> vector<8x256xf32>
    %c256_i32 = arith.constant 256 : i32
    %6 = arith.muli %arg1, %c256_i32 : i32
    %7 = tpu.iota {dimensions = array<i32: 1>} : vector<1x256xi32>
    %8 = vector.broadcast %6 : i32 to vector<1x256xi32>
    %9 = arith.addi %8, %7 : vector<1x256xi32>
    %cst_4 = arith.constant dense<0xFF800000> : vector<8xf32>
    %10 = vector.multi_reduction <maximumf>, %5, %cst_4 [1] : vector<8x256xf32> to vector<8xf32>
    %11 = vector.shape_cast %10 : vector<8xf32> to vector<8x1xf32>
    %12 = vector.broadcast %11 : vector<8x1xf32> to vector<8x256xf32>
    %13 = arith.cmpf oeq, %5, %12 : vector<8x256xf32>
    %c2147483647_i32 = arith.constant 2147483647 : i32
    %14 = vector.shape_cast %9 : vector<1x256xi32> to vector<1x256xi32>
    %15 = vector.broadcast %14 : vector<1x256xi32> to vector<8x256xi32>
    %16 = vector.broadcast %c2147483647_i32 : i32 to vector<8x256xi32>
    %17 = arith.select %13, %15, %16 : vector<8x256xi1>, vector<8x256xi32>
    %cst_5 = arith.constant dense<2147483647> : vector<8xi32>
    %18 = vector.multi_reduction <minsi>, %17, %cst_5 [1] : vector<8x256xi32> to vector<8xi32>
    %19 = vector.shape_cast %18 : vector<8xi32> to vector<8x1xi32>
    %c0_6 = arith.constant 0 : index
    %c0_7 = arith.constant 0 : index
    %20 = vector.load %arg7[%c0_6, %c0_7] : memref<8x1xf32, #tpu.memory_space<vmem>>, vector<8x1xf32>
    %21 = arith.cmpf ogt, %11, %20 : vector<8x1xf32>
    %c0_8 = arith.constant 0 : index
    %c0_9 = arith.constant 0 : index
    %22 = vector.load %arg7[%c0_8, %c0_9] : memref<8x1xf32, #tpu.memory_space<vmem>>, vector<8x1xf32>
    %23 = arith.select %21, %11, %22 : vector<8x1xi1>, vector<8x1xf32>
    %c0_10 = arith.constant 0 : index
    %c0_11 = arith.constant 0 : index
    %24 = vector.load %arg7[%c0_10, %c0_11] : memref<8x1xf32, #tpu.memory_space<vmem>>, vector<8x1xf32>
    tpu.vector_store %arg7[%c0_10, %c0_11], %23 {strides = array<i32>} : memref<8x1xf32, #tpu.memory_space<vmem>>, vector<8x1xf32>,
    %c0_12 = arith.constant 0 : index
    %c0_13 = arith.constant 0 : index
    %25 = vector.load %arg8[%c0_12, %c0_13] : memref<8x1xi32, #tpu.memory_space<vmem>>, vector<8x1xi32>
    %26 = arith.select %21, %19, %25 : vector<8x1xi1>, vector<8x1xi32>
    %c0_14 = arith.constant 0 : index
    %c0_15 = arith.constant 0 : index
    %27 = vector.load %arg8[%c0_14, %c0_15] : memref<8x1xi32, #tpu.memory_space<vmem>>, vector<8x1xi32>
    tpu.vector_store %arg8[%c0_14, %c0_15], %26 {strides = array<i32>} : memref<8x1xi32, #tpu.memory_space<vmem>>, vector<8x1xi32>,
    %c1_i32 = arith.constant 1 : i32
    %28 = arith.cmpi eq, %arg1, %c1_i32 : i32
    %29 = arith.extui %28 : i1 to i32
    %c0_i32_16 = arith.constant 0 : i32
    %30 = arith.cmpi ne, %29, %c0_i32_16 : i32
    scf.if %30 {
      %c0_17 = arith.constant 0 : index
      %c0_18 = arith.constant 0 : index
      %31 = vector.load %arg8[%c0_17, %c0_18] : memref<8x1xi32, #tpu.memory_space<vmem>>, vector<8x1xi32>
      %c0_19 = arith.constant 0 : index
      %c0_20 = arith.constant 0 : index
      %32 = vector.load %arg5[%c0_19, %c0_20] : memref<8x1xi32, #tpu.memory_space<vmem>>, vector<8x1xi32>
      tpu.vector_store %arg5[%c0_19, %c0_20], %31 {strides = array<i32>} : memref<8x1xi32, #tpu.memory_space<vmem>>, vector<8x1xi32>,
    } else {
    }
    return
  }
  func.func @transform_0(%arg0: i32, %arg1: i32) -> (i32, i32) {
    %c0_i32 = arith.constant 0 : i32
    %c0_i32_0 = arith.constant 0 : i32
    return %arg0, %c0_i32 : i32, i32
  }
  func.func @transform_1(%arg0: i32, %arg1: i32) -> (i32, i32) {
    %c0_i32 = arith.constant 0 : i32
    %c0_i32_0 = arith.constant 0 : i32
    %c0_i32_1 = arith.constant 0 : i32
    return %c0_i32, %c0_i32_0 : i32, i32
  }
  func.func @transform_2(%arg0: i32, %arg1: i32) -> (i32, i32) {
    %c0_i32 = arith.constant 0 : i32
    %c0_i32_0 = arith.constant 0 : i32
    return %arg1, %c0_i32 : i32, i32
  }
  func.func @transform_3(%arg0: i32, %arg1: i32) -> (i32, i32) {
    %c0_i32 = arith.constant 0 : i32
    %c0_i32_0 = arith.constant 0 : i32
    return %arg0, %c0_i32 : i32, i32
  }
}

</mosaic_0001>

<llo_original>
// kernel: tpu_custom_call.1
$region0: #{tpu_custom_call.1}
  #allocation0 [shape = 'u32[]', space=smem, size = 0x4, offset = 0x4, fixed_abs, tag = 'smem constant byte address 0x4 - core index']
  #allocation1 [shape = 'u32[144,128]{1,0:T(1,128)}', space=vmem, size = 0x12000, scoped, tag = 'internal scratch']
  #allocation2 [shape = 'bf16[8,32]{1,0:T(8,128)(2,1)}', space=vmem, size = 0x800, scoped, tag = 'scratch operand']
  #allocation3 [shape = 'f32[8,1]{1,0:T(8,128)}', space=vmem, size = 0x1000, scoped, tag = 'scratch operand']
  #allocation4 [shape = 's32[8,1]{1,0:T(8,128)}', space=vmem, size = 0x1000, scoped, tag = 'scratch operand']
  %s0 = inlined_call_operand.vmem [shape: f32[16,32], index: 0, kind: input, shape index: {}]
  %s1 = inlined_call_operand.vmem [shape: f32[1,32], index: 1, kind: input, shape index: {}]
  %s2 = inlined_call_operand.vmem [shape: bf16[512,32], index: 2, kind: input, shape index: {}]
  %s3 = inlined_call_operand.vmem [shape: s32[16,1], index: 3, kind: output, shape index: {}]
  %s4 = sld [smem:[#allocation0]]
  $region53: #{tpu_custom_call.1} parent=0
    _
  %s6 = ssub.s32 1, %s4
  %s7 = scalar_select 0, %s6, %s4
  loop: start=0, step=1, limit=6
  $region2: #{tpu_custom_call.1} parent=0 // loop_pre_header
    _
  $region3: #{tpu_custom_call.1} parent=0 // loop_header
    %s9 = sphi 0, %s13
    %p10 = scmp.ge.s32.totalorder %s9, 6
    %s16 = sphi 0, %s28
    %s17 = sphi 0, %s24
    %s18 = sphi 0, %s16
    %s19 = sphi 0, %s17
    %s20 = sphi 0, %s18
    %s21 = sphi 0, %s19
    %s31 = sphi 0, %s33
    %s34 = sphi 0, %s31
    %s35 = sphi 0, %s34
    %s51 = sphi 0, %s35
    %s55 = sphi 0, %s55
    %s57 = sphi 0, %s55
    %s58 = sphi 0, %s57
    %s72 = sphi 0, %s58
    %s78 = sphi 0, %s80
    %s81 = sphi 0, %s78
    %s82 = sphi 0, %s81
    %s98 = sphi 0, %s82
    %s104 = sphi 0, %s106
    %s107 = sphi 0, %s104
    %s108 = sphi 0, %s107
    %s124 = sphi 0, %s108
  $region4: #{tpu_custom_call.1} parent=0 // loop_header_branch
    %12 = sbr.rel (%p10) target = $region8
  $region5: #{tpu_custom_call.1} parent=0 // loop_body
    %s14 = ssub.s32 %s9, 1
    %s15 = ssub.s32 %s9, 2
    %s22 = sadd.s32 1, %s17
    %p23 = scmp.ge.s32.totalorder %s22, 2
    %s24 = scalar_select %p23, 0, %s22
    %s25 = sadd.s32 1, %s16
    %s26 = scalar_select %p23, %s25, %s16
    %p27 = scmp.ge.s32.totalorder %s26, 2
    %s28 = scalar_select %p27, 0, %s26
    %s29 = ssub.s32 %s16, %s28
    %p30 = scmp.eq.s32.totalorder %s29, 0
    %s32 = sadd.s32 %s31, 1
    %s33 = scalar_select %p30, %s31, %s32
    %p36 = pneg %p30
    %p37 = scmp.eq.s32.totalorder %s9, 3
    %p38 = por %p36, %p37
    %p39 = scmp.ne.s32.totalorder %s31, %s34
    %p40 = scmp.eq.s32.totalorder %s9, 0
    %p41 = por %p39, %p40
    %p42 = scmp.ne.s32.totalorder %s31, %s34
    %p43 = scmp.eq.s32.totalorder %s14, 3
    %p44 = por %p42, %p43
    %p45 = scmp.ne.s32.totalorder %s34, %s35
    %p46 = scmp.eq.s32.totalorder %s14, 0
    %p47 = por %p45, %p46
    %p48 = scmp.ne.s32.totalorder %s34, %s35
    %p49 = scmp.eq.s32.totalorder %s15, 3
    %p50 = por %p48, %p49
    %p52 = scmp.ne.s32.totalorder %s35, %s51
    %p53 = scmp.eq.s32.totalorder %s15, 0
    %p54 = por %p52, %p53
    %s56 = sadd.s32 %s55, 1
    %p59 = scmp.eq.s32.totalorder %s9, 3
    %p60 = scmp.ne.s32.totalorder %s55, %s57
    %p61 = scmp.eq.s32.totalorder %s9, 0
    %p62 = por %p60, %p61
    %p63 = scmp.ne.s32.totalorder %s55, %s57
    %p64 = scmp.eq.s32.totalorder %s14, 3
    %p65 = por %p63, %p64
    %p66 = scmp.ne.s32.totalorder %s57, %s58
    %p67 = scmp.eq.s32.totalorder %s14, 0
    %p68 = por %p66, %p67
    %p69 = scmp.ne.s32.totalorder %s57, %s58
    %p70 = scmp.eq.s32.totalorder %s15, 3
    %p71 = por %p69, %p70
    %p73 = scmp.ne.s32.totalorder %s58, %s72
    %p74 = scmp.eq.s32.totalorder %s15, 0
    %p75 = por %p73, %p74
    %s76 = ssub.s32 %s17, %s24
    %p77 = scmp.eq.s32.totalorder %s76, 0
    %s79 = sadd.s32 %s78, 1
    %s80 = scalar_select %p77, %s78, %s79
    %p83 = pneg %p77
    %p84 = scmp.eq.s32.totalorder %s9, 3
    %p85 = por %p83, %p84
    %p86 = scmp.ne.s32.totalorder %s78, %s81
    %p87 = scmp.eq.s32.totalorder %s9, 0
    %p88 = por %p86, %p87
    %p89 = scmp.ne.s32.totalorder %s78, %s81
    %p90 = scmp.eq.s32.totalorder %s14, 3
    %p91 = por %p89, %p90
    %p92 = scmp.ne.s32.totalorder %s81, %s82
    %p93 = scmp.eq.s32.totalorder %s14, 0
    %p94 = por %p92, %p93
    %p95 = scmp.ne.s32.totalorder %s81, %s82
    %p96 = scmp.eq.s32.totalorder %s15, 3
    %p97 = por %p95, %p96
    %p99 = scmp.ne.s32.totalorder %s82, %s98
    %p100 = scmp.eq.s32.totalorder %s15, 0
    %p101 = por %p99, %p100
    %s102 = ssub.s32 %s16, %s28
    %p103 = scmp.eq.s32.totalorder %s102, 0
    %s105 = sadd.s32 %s104, 1
    %s106 = scalar_select %p103, %s104, %s105
    %p109 = pneg %p103
    %p110 = scmp.eq.s32.totalorder %s9, 3
    %p111 = por %p109, %p110
    %p112 = scmp.ne.s32.totalorder %s104, %s107
    %p113 = scmp.eq.s32.totalorder %s9, 0
    %p114 = por %p112, %p113
    %p115 = scmp.ne.s32.totalorder %s104, %s107
    %p116 = scmp.eq.s32.totalorder %s14, 3
    %p117 = por %p115, %p116
    %p118 = scmp.ne.s32.totalorder %s107, %s108
    %p119 = scmp.eq.s32.totalorder %s14, 0
    %p120 = por %p118, %p119
    %p121 = scmp.ne.s32.totalorder %s107, %s108
    %p122 = scmp.eq.s32.totalorder %s15, 3
    %p123 = por %p121, %p122
    %p125 = scmp.ne.s32.totalorder %s108, %s124
    %p126 = scmp.eq.s32.totalorder %s15, 0
    %p127 = por %p125, %p126
    %p128 = scmp.le.s32.totalorder 1, %s9
    %p129 = scmp.lt.s32.totalorder %s9, 5
    %p130 = pnand %p128, %p129
    %p131 = pneg %p130
    // Predicated region
    $region9: #{tpu_custom_call.1} parent=5 // pred_check
      _
    $region10: #{tpu_custom_call.1} parent=5 // pred_check_branch
      %133 = sbr.rel (%p130) target = $region12
    $region11: #{tpu_custom_call.1} parent=5 // pred_region
      %s134 = ssub.s32 %s9, 1
      // Predicated region
      $region13: #{tpu_custom_call.1} parent=11 // pred_check
        %p135 = pneg %p68
      $region14: #{tpu_custom_call.1} parent=11 // pred_check_branch
        %137 = sbr.rel (%p135) target = $region16
      $region15: #{tpu_custom_call.1} parent=11 // pred_region
        _
      $region16: #{tpu_custom_call.1} parent=11 // pred_fallthru
        _
    $region12: #{tpu_custom_call.1} parent=5 // pred_fallthru
      _
    %p138 = scmp.lt.s32.totalorder %s9, 4
    // Predicated region
    $region17: #{tpu_custom_call.1} parent=5 // pred_check
      %p139 = pneg %p138
    $region18: #{tpu_custom_call.1} parent=5 // pred_check_branch
      %141 = sbr.rel (%p139) target = $region20
    $region19: #{tpu_custom_call.1} parent=5 // pred_region
      // Predicated region
      $region21: #{tpu_custom_call.1} parent=19 // pred_check
        %p142 = pneg %p41
      $region22: #{tpu_custom_call.1} parent=19 // pred_check_branch
        %144 = sbr.rel (%p142) target = $region24
      $region23: #{tpu_custom_call.1} parent=19 // pred_region
        %p145 = scmp.lt.s32.totalorder %s16, 1
        %s146 = scalar_select %p145, %s16, 1
        %s147 = smul.addr %s146, 8
        %s148 = scalar_lea.vmem %s0, %s147
      $region24: #{tpu_custom_call.1} parent=19 // pred_fallthru
        _
      // Predicated region
      $region25: #{tpu_custom_call.1} parent=19 // pred_check
        %p149 = pneg %p88
      $region26: #{tpu_custom_call.1} parent=19 // pred_check_branch
        %151 = sbr.rel (%p149) target = $region28
      $region27: #{tpu_custom_call.1} parent=19 // pred_region
        %s152 = smul.u32 32, %s17
        %p153 = scmp.lt.s32.totalorder %s152, 63
        %s154 = scalar_select %p153, %s152, 63
        %s155 = smul.addr %s154, 4
        %s156 = scalar_lea.vmem %s2, %s155
        %s157 = smul.u32 32, %s17
      $region28: #{tpu_custom_call.1} parent=19 // pred_fallthru
        _
    $region20: #{tpu_custom_call.1} parent=5 // pred_fallthru
      _
    %p158 = scmp.le.s32.totalorder 1, %s9
    %p159 = scmp.lt.s32.totalorder %s9, 5
    %p160 = pnand %p158, %p159
    %p161 = pneg %p160
    // Predicated region
    $region29: #{tpu_custom_call.1} parent=5 // pred_check
      _
    $region30: #{tpu_custom_call.1} parent=5 // pred_check_branch
      %163 = sbr.rel (%p160) target = $region32
    $region31: #{tpu_custom_call.1} parent=5 // pred_region
      %s164 = ssub.s32 %s9, 1
      %p165 = scmp.lt.s32.totalorder %s18, 1
      %s166 = scalar_select %p165, %s18, 1
      %s167 = smul.addr %s166, 8
      %s168 = scalar_lea.vmem %s0, %s167
      %p169 = pneg %p47
      %p170 = pneg %p44
      %p171 = pneg %p68
      %p172 = pneg %p65
      %s173 = smul.u32 32, %s19
      %p174 = scmp.lt.s32.totalorder %s173, 63
      %s175 = scalar_select %p174, %s173, 63
      %s176 = smul.addr %s175, 4
      %s177 = scalar_lea.vmem %s2, %s176
      %p178 = pneg %p94
      %p179 = pneg %p91
      %p180 = pneg %p120
      %p181 = pneg %p117
      %p182 = scmp.lt.s32.totalorder %s18, 1
      %s183 = scalar_select %p182, %s18, 1
      %s184 = smul.addr %s183, 8
      %s185 = scalar_lea.vmem %s3, %s184
      %p186 = scmp.lt.s32.totalorder %s18, 1
      %s187 = scalar_select %p186, %s18, 1
      %s188 = smul.addr %s187, 8
      %s189 = scalar_lea.vmem %s0, %s188
      %s190 = smul.u32 32, %s19
      %p191 = scmp.lt.s32.totalorder %s190, 63
      %s192 = scalar_select %p191, %s190, 63
      %s193 = smul.addr %s192, 4
      %s194 = scalar_lea.vmem %s2, %s193
      %s195 = smul.u32 32, %s19
      %p196 = scmp.lt.s32.totalorder %s18, 1
      %s197 = scalar_select %p196, %s18, 1
      %s198 = smul.addr %s197, 8
      %s199 = scalar_lea.vmem %s3, %s198
      %p201 = scmp.eq.s32.totalorder %s19, 0
      // Predicated region
      $region33: #{tpu_custom_call.1} parent=31 // pred_check
        %p202 = pneg %p201
      $region34: #{tpu_custom_call.1} parent=31 // pred_check_branch
        %204 = sbr.rel (%p202) target = $region36
      $region35: #{tpu_custom_call.1} parent=31 // pred_region
        %v205 = vld [vmem:[%s189] sm:$0xff]
        %v206 = vmul.f32 %v205, %v205
        %vm207 = vcmask 261120
        %v208 = vsel %vm207, %v206, 0.0
        %209 = vadd.xlane.f32.xlu0 %v208
        %v210 = vpop.xlane.xlu0 %209
        %v211 = vrcp.pop 32.0
        %v212 = vmul.f32 %v210, %v211
        %v213 = vadd.f32 %v212, 1e-06
        %v214 = vrsqrt.pop %v213
        %v215 = vmul.f32 %v205, %v214
        %v216 = vld [vmem:[%s1] sm:$0x1]
        %v218 = vlaneseq
        %v219 = vshrl.u32 %v218, 7
        %v220 = vsub.s32 0, %v219
        %v221 = vrot.slane %v216, %v220
        %v223 = vmul.f32 %v215, %v221
        %v224 = vpack.c.bf16 %v223, %v223
        %vm225 = vcmask 257024
        %226 = vst.msk [vmem:[#allocation2] sm:$0xf] %vm225, %v224
        %vm227 = vcmask 7168
        %228 = vst.msk [vmem:[#allocation3] sm:$0xff] %vm227, -inf
        %229 = vst.msk [vmem:[#allocation4] sm:$0xff] %vm227, 0
      $region36: #{tpu_custom_call.1} parent=31 // pred_fallthru
        _
      %v230 = vld [vmem:[#allocation2] sm:$0xf]
      %v231 = vld [vmem:[%s194] sm:$0xf]
      %v232 = vld [vmem:[%s194 + $0x4] sm:$0xf]
      %v233 = vld [vmem:[%s194 + $0x8] sm:$0xf]
      %v234 = vld [vmem:[%s194 + $0xc] sm:$0xf]
      %v235 = vld [vmem:[%s194 + $0x10] sm:$0xf]
      %v236 = vld [vmem:[%s194 + $0x14] sm:$0xf]
      %v237 = vld [vmem:[%s194 + $0x18] sm:$0xf]
      %v238 = vld [vmem:[%s194 + $0x1c] sm:$0xf]
      %v239 = vld [vmem:[%s194 + $0x20] sm:$0xf]
      %v240 = vld [vmem:[%s194 + $0x24] sm:$0xf]
      %v241 = vld [vmem:[%s194 + $0x28] sm:$0xf]
      %v242 = vld [vmem:[%s194 + $0x2c] sm:$0xf]
      %v243 = vld [vmem:[%s194 + $0x30] sm:$0xf]
      %v244 = vld [vmem:[%s194 + $0x34] sm:$0xf]
      %v245 = vld [vmem:[%s194 + $0x38] sm:$0xf]
      %v246 = vld [vmem:[%s194 + $0x3c] sm:$0xf]
      %v247 = vld [vmem:[%s194 + $0x40] sm:$0xf]
      %v248 = vld [vmem:[%s194 + $0x44] sm:$0xf]
      %v249 = vld [vmem:[%s194 + $0x48] sm:$0xf]
      %v250 = vld [vmem:[%s194 + $0x4c] sm:$0xf]
      %v251 = vld [vmem:[%s194 + $0x50] sm:$0xf]
      %v252 = vld [vmem:[%s194 + $0x54] sm:$0xf]
      %v253 = vld [vmem:[%s194 + $0x58] sm:$0xf]
      %v254 = vld [vmem:[%s194 + $0x5c] sm:$0xf]
      %v255 = vld [vmem:[%s194 + $0x60] sm:$0xf]
      %v256 = vld [vmem:[%s194 + $0x64] sm:$0xf]
      %v257 = vld [vmem:[%s194 + $0x68] sm:$0xf]
      %v258 = vld [vmem:[%s194 + $0x6c] sm:$0xf]
      %v259 = vld [vmem:[%s194 + $0x70] sm:$0xf]
      %v260 = vld [vmem:[%s194 + $0x74] sm:$0xf]
      %v261 = vld [vmem:[%s194 + $0x78] sm:$0xf]
      %v262 = vld [vmem:[%s194 + $0x7c] sm:$0xf]
      %v295 = vunpack.c.l.b16 %v231
      %v296 = vunpack.c.l.b16 %v232
      %v297 = vunpack.c.l.b16 %v233
      %v298 = vunpack.c.l.b16 %v234
      %v299 = vunpack.c.l.b16 %v235
      %v300 = vunpack.c.l.b16 %v236
      %v301 = vunpack.c.l.b16 %v237
      %v302 = vunpack.c.l.b16 %v238
      %v303 = vunpack.c.l.b16 %v239
      %v304 = vunpack.c.l.b16 %v240
      %v305 = vunpack.c.l.b16 %v241
      %v306 = vunpack.c.l.b16 %v242
      %v307 = vunpack.c.l.b16 %v243
      %v308 = vunpack.c.l.b16 %v244
      %v309 = vunpack.c.l.b16 %v245
      %v310 = vunpack.c.l.b16 %v246
      %v311 = vunpack.c.l.b16 %v247
      %v312 = vunpack.c.l.b16 %v248
      %v313 = vunpack.c.l.b16 %v249
      %v314 = vunpack.c.l.b16 %v250
      %v315 = vunpack.c.l.b16 %v251
      %v316 = vunpack.c.l.b16 %v252
      %v317 = vunpack.c.l.b16 %v253
      %v318 = vunpack.c.l.b16 %v254
      %v319 = vunpack.c.l.b16 %v255
      %v320 = vunpack.c.l.b16 %v256
      %v321 = vunpack.c.l.b16 %v257
      %v322 = vunpack.c.l.b16 %v258
      %v323 = vunpack.c.l.b16 %v259
      %v324 = vunpack.c.l.b16 %v260
      %v325 = vunpack.c.l.b16 %v261
      %v326 = vunpack.c.l.b16 %v262
      %v327 = vpack.c.b16 %v296, %v295
      %v328 = vpack.c.b16 %v298, %v297
      %v329 = vpack.c.b16 %v300, %v299
      %v330 = vpack.c.b16 %v302, %v301
      %v331 = vpack.c.b16 %v304, %v303
      %v332 = vpack.c.b16 %v306, %v305
      %v333 = vpack.c.b16 %v308, %v307
      %v334 = vpack.c.b16 %v310, %v309
      %v335 = vpack.c.b16 %v312, %v311
      %v336 = vpack.c.b16 %v314, %v313
      %v337 = vpack.c.b16 %v316, %v315
      %v338 = vpack.c.b16 %v318, %v317
      %v339 = vpack.c.b16 %v320, %v319
      %v340 = vpack.c.b16 %v322, %v321
      %v341 = vpack.c.b16 %v324, %v323
      %v342 = vpack.c.b16 %v326, %v325
      %vm343 = vcmask 261120
      %v345 = vsel %vm343, %v230, 0
      %v348 = vsel %vm343, %v327, 0
      %v351 = vsel %vm343, %v328, 0
      %v354 = vsel %vm343, %v329, 0
      %v357 = vsel %vm343, %v330, 0
      %v360 = vsel %vm343, %v331, 0
      %v363 = vsel %vm343, %v332, 0
      %v366 = vsel %vm343, %v333, 0
      %v369 = vsel %vm343, %v334, 0
      %v372 = vsel %vm343, %v335, 0
      %v375 = vsel %vm343, %v336, 0
      %v378 = vsel %vm343, %v337, 0
      %v381 = vsel %vm343, %v338, 0
      %v384 = vsel %vm343, %v339, 0
      %v387 = vsel %vm343, %v340, 0
      %v390 = vsel %vm343, %v341, 0
      %v393 = vsel %vm343, %v342, 0
      %395 = vmatprep.subr.bf16.mxu0 0
      %396 = vmatpush1.bf16.xpose.msra.mxu0 %v348
      %397 = vmatprep.subr.bf16.mxu0 0
      %398 = vmatpush1.bf16.xpose.msra.mxu0 %v351
      %399 = vmatprep.subr.bf16.mxu0 0
      %400 = vmatpush1.bf16.xpose.msra.mxu0 %v354
      %401 = vmatprep.subr.bf16.mxu0 0
      %402 = vmatpush1.bf16.xpose.msra.mxu0 %v357
      %403 = vmatprep.subr.bf16.mxu0 0
      %404 = vmatpush1.bf16.xpose.msra.mxu0 %v360
      %405 = vmatprep.subr.bf16.mxu0 0
      %406 = vmatpush1.bf16.xpose.msra.mxu0 %v363
      %407 = vmatprep.subr.bf16.mxu0 0
      %408 = vmatpush1.bf16.xpose.msra.mxu0 %v366
      %409 = vmatprep.subr.bf16.mxu0 0
      %410 = vmatpush1.bf16.xpose.msra.mxu0 %v369
      %411 = vmatprep.subr.bf16.mxu0 0
      %412 = vmatpush1.bf16.xpose.msra.mxu0 %v372
      %413 = vmatprep.subr.bf16.mxu0 0
      %414 = vmatpush1.bf16.xpose.msra.mxu0 %v375
      %415 = vmatprep.subr.bf16.mxu0 0
      %416 = vmatpush1.bf16.xpose.msra.mxu0 %v378
      %417 = vmatprep.subr.bf16.mxu0 0
      %418 = vmatpush1.bf16.xpose.msra.mxu0 %v381
      %419 = vmatprep.subr.bf16.mxu0 0
      %420 = vmatpush1.bf16.xpose.msra.mxu0 %v384
      %421 = vmatprep.subr.bf16.mxu0 0
      %422 = vmatpush1.bf16.xpose.msra.mxu0 %v387
      %423 = vmatprep.subr.bf16.mxu0 0
      %424 = vmatpush1.bf16.xpose.msra.mxu0 %v390
      %425 = vmatprep.subr.bf16.mxu0 0
      %426 = vmatpush1.bf16.xpose.msra.mxu0 %v393
      %427 = vmatprep.mubr.bf16.mxu0 0
      %428 = vmatmul.mubr.bf16.gmra.mrb[0].mxu0 %v345
      %v429 = vpop.f32.mrb[0].mxu0
      %v430 = vadd.f32 0.0, %v429
      %v431 = vpop.f32.mrb[0].mxu0
      %v432 = vadd.f32 0.0, %v431
      %v433 = vpop.f32.mrb[0].mxu0
      %v434 = vpop.f32.mrb[0].mxu0
      %435 = vdwg.mxu0
      %s436 = smul.u32 %s19, 256
      %v437 = vlaneseq
      %v438 = vand.u32 %v437, 127
      %v439 = vadd.s32 %v438, 128
      %v440 = vstv %s436
      %v441 = vadd.s32 %v440, %v438
      %v442 = vadd.s32 %v440, %v439
      %v443 = vmax.f32 %v430, %v432
      %444 = vmax.xlane.f32.xlu0 %v443
      %v445 = vpop.xlane.xlu0 %444
      %vm446 = vcmp.eq.f32.partialorder %v430, %v445
      %vm447 = vcmp.eq.f32.partialorder %v432, %v445
      %v448 = vsel %vm446, %v441, 2147483647
      %v449 = vsel %vm447, %v442, 2147483647
      %vm450 = vcmp.lt.s32.totalorder %v448, %v449
      %v451 = vsel %vm450, %v448, %v449
      %v452 = vand.u32 %v451, 65535
      %v453 = vshra.s32 %v451, 16
      %v454 = vcvt.s32.f32 %v452
      %v455 = vcvt.s32.f32 %v453
      %456 = vmin.xlane.f32.xlu0 %v455
      %v457 = vpop.xlane.xlu0 %456
      %vm458 = vcmp.eq.f32.partialorder %v455, %v457
      %v459 = vsel %vm458, %v454, inf
      %460 = vmin.xlane.f32.xlu0 %v459
      %v461 = vpop.xlane.xlu0 %460
      %v462 = vcvt.f32.s32 %v461
      %v463 = vcvt.f32.s32 %v457
      %v464 = vshll.u32 %v463, 16
      %v465 = vadd.s32 %v464, %v462
      %v466 = vld [vmem:[#allocation3] sm:$0xff]
      %vm467 = vcmp.gt.f32.partialorder %v445, %v466
      %v468 = vsel %vm467, %v445, %v466
      %vm469 = vcmask 7168
      %470 = vst.msk [vmem:[#allocation3] sm:$0xff] %vm469, %v468
      %v471 = vld [vmem:[#allocation4] sm:$0xff]
      %v472 = vsel %vm467, %v465, %v471
      %473 = vst.msk [vmem:[#allocation4] sm:$0xff] %vm469, %v472
      %p474 = scmp.eq.s32.totalorder %s19, 1
      // Predicated region
      $region37: #{tpu_custom_call.1} parent=31 // pred_check
        %p475 = pneg %p474
      $region38: #{tpu_custom_call.1} parent=31 // pred_check_branch
        %477 = sbr.rel (%p475) target = $region40
      $region39: #{tpu_custom_call.1} parent=31 // pred_region
        %v478 = vld [vmem:[#allocation4] sm:$0xff]
        %479 = vst.msk [vmem:[%s199] sm:$0xff] %vm469, %v478
      $region40: #{tpu_custom_call.1} parent=31 // pred_fallthru
        _
      %p480 = scmp.lt.s32.totalorder %s18, 1
      %s481 = scalar_select %p480, %s18, 1
      %s482 = smul.addr %s481, 8
      %s483 = scalar_lea.vmem %s3, %s482
      // Predicated region
      $region41: #{tpu_custom_call.1} parent=31 // pred_check
        %p484 = pneg %p117
      $region42: #{tpu_custom_call.1} parent=31 // pred_check_branch
        %486 = sbr.rel (%p484) target = $region44
      $region43: #{tpu_custom_call.1} parent=31 // pred_region
        _
      $region44: #{tpu_custom_call.1} parent=31 // pred_fallthru
        _
    $region32: #{tpu_custom_call.1} parent=5 // pred_fallthru
      _
    %p487 = scmp.le.s32.totalorder 2, %s9
    // Predicated region
    $region45: #{tpu_custom_call.1} parent=5 // pred_check
      %p488 = pneg %p487
    $region46: #{tpu_custom_call.1} parent=5 // pred_check_branch
      %490 = sbr.rel (%p488) target = $region48
    $region47: #{tpu_custom_call.1} parent=5 // pred_region
      %s491 = ssub.s32 %s9, 2
      // Predicated region
      $region49: #{tpu_custom_call.1} parent=47 // pred_check
        %p492 = pneg %p123
      $region50: #{tpu_custom_call.1} parent=47 // pred_check_branch
        %494 = sbr.rel (%p492) target = $region52
      $region51: #{tpu_custom_call.1} parent=47 // pred_region
        %p495 = scmp.lt.s32.totalorder %s20, 1
        %s496 = scalar_select %p495, %s20, 1
        %s497 = smul.addr %s496, 8
        %s498 = scalar_lea.vmem %s3, %s497
      $region52: #{tpu_custom_call.1} parent=47 // pred_fallthru
        _
    $region48: #{tpu_custom_call.1} parent=5 // pred_fallthru
      _
  $region6: #{tpu_custom_call.1} parent=0 // loop_footer
    %s13 = sadd.s32 1, %s9
  $region7: #{tpu_custom_call.1} parent=0 // loop_footer_branch
    %8 = sbr.rel target = $region3
  $region8: #{tpu_custom_call.1} parent=0 // loop_exit
    _

</llo_original>
